<compile_context>
chip_gen: v7x
topology: tpu7x:2x2x1
jax: 0.10.0
libtpu: 0.0.40
codegen_flags: <defaults>
</compile_context>

<pallas_src>
import jax
import jax.numpy as jnp
from jax.experimental import pallas as pl
from jax.experimental.pallas import tpu as pltpu

_LANE = 1024   # lane-axis width: large multiple of 128 -> unmasked stores
_TR = 512      # row tile: 512*1024*4B = 2 MiB per f32 block


def _scaled_relu_kernel(m_ref, x_ref, o_ref):
    # m lives in SMEM as f32; cast to the compute dtype so output dtype == x dtype.
    m = m_ref[0].astype(x_ref.dtype)
    x = x_ref[...]
    o_ref[...] = jnp.maximum(x * m, jnp.zeros((), dtype=x_ref.dtype))


def scaled_relu(x, m=1.0):
    """relu(m * x), elementwise, any shape, float dtype (f32 / bf16)."""
    orig_shape = x.shape
    orig_dtype = x.dtype
    total = int(x.size)
    if total == 0:
        return x

    flat = x.reshape(-1)

    # Lane-dense 2D view: (rows, _LANE).
    rows = pl.cdiv(total, _LANE)
    if rows <= _TR:
        # Single row-tile: block equals the full row extent (always legal).
        tr = int(rows)
        rows_padded = int(rows)
    else:
        tr = _TR
        rows_padded = int(pl.cdiv(rows, _TR) * _TR)

    padded_total = rows_padded * _LANE
    if padded_total != total:
        flat = jnp.pad(flat, (0, padded_total - total))
    x2d = flat.reshape(rows_padded, _LANE)

    m_arr = jnp.asarray([m], dtype=jnp.float32)

    grid = (rows_padded // tr,)

    out2d = pl.pallas_call(
        _scaled_relu_kernel,
        out_shape=jax.ShapeDtypeStruct((rows_padded, _LANE), orig_dtype),
        grid=grid,
        in_specs=[
            pl.BlockSpec(memory_space=pltpu.MemorySpace.SMEM),  # m scalar
            pl.BlockSpec((tr, _LANE), lambda i: (i, 0)),
        ],
        out_specs=pl.BlockSpec((tr, _LANE), lambda i: (i, 0)),
        compiler_params=pltpu.CompilerParams(
            dimension_semantics=("parallel",)),
    )(m_arr, x2d)

    out_flat = out2d.reshape(-1)
    if padded_total != total:
        out_flat = out_flat[:total]
    return out_flat.reshape(orig_shape)


if __name__ == "__main__":
    key = jax.random.PRNGKey(0)
    m = 2.5

    # Small NCHW input consistent with typical usage of the activation.
    x = jax.random.normal(key, (2, 4, 16, 16), dtype=jnp.float32)
    y = jax.block_until_ready(scaled_relu(x, m=m))
    y_ref = jnp.maximum(m * x, 0.0)
    assert y.shape == x.shape and y.dtype == x.dtype
    assert jnp.allclose(y, y_ref, atol=1e-6, rtol=1e-6)

    # Non-divisible size exercises the padding / ragged-tail path.
    k2 = jax.random.PRNGKey(1)
    x2 = jax.random.normal(k2, (3, 5, 7, 9), dtype=jnp.float32)
    y2 = jax.block_until_ready(scaled_relu(x2, m=-1.25))
    assert jnp.allclose(y2, jnp.maximum(-1.25 * x2, 0.0), atol=1e-6, rtol=1e-6)

    # bf16 path (dtype preserved through the kernel).
    x3 = jax.random.normal(jax.random.PRNGKey(2), (2, 4, 16, 16),
                           dtype=jnp.bfloat16)
    y3 = jax.block_until_ready(scaled_relu(x3, m=m))
    y3_ref = jnp.maximum(jnp.bfloat16(m) * x3, jnp.bfloat16(0.0))
    assert y3.dtype == jnp.bfloat16
    assert jnp.allclose(y3.astype(jnp.float32), y3_ref.astype(jnp.float32),
                        atol=1e-2, rtol=1e-2)

    print("KERNEL_OK")
</pallas_src>

<mosaic_0001>
module attributes {stable_mosaic.version = 11 : i64} {
  func.func @_scaled_relu_kernel(%arg0: i32, %arg1: memref<1xf32, #tpu.memory_space<smem>>, %arg2: memref<2x1024xf32, #tpu.memory_space<vmem>>, %arg3: memref<2x1024xf32, #tpu.memory_space<vmem>>) attributes {dimension_semantics = [#tpu.dimension_semantics<parallel>], iteration_bounds = array<i64: 1>, scalar_prefetch = 0 : i64, scratch_operands = 0 : i64, tpu.core_type = #tpu.core_type<tc>, window_params = [{transform_indices = @transform_0, window_bounds = array<i64: 1>}, {transform_indices = @transform_1, window_bounds = array<i64: 2, 1024>}, {transform_indices = @transform_2, window_bounds = array<i64: 2, 1024>}]} {
    %c0 = arith.constant 0 : index
    %0 = memref.load %arg1[%c0] : memref<1xf32, #tpu.memory_space<smem>>
    %c0_0 = arith.constant 0 : index
    %c0_1 = arith.constant 0 : index
    %1 = vector.load %arg2[%c0_0, %c0_1] : memref<2x1024xf32, #tpu.memory_space<vmem>>, vector<2x1024xf32>
    %2 = vector.broadcast %0 : f32 to vector<2x1024xf32>
    %3 = arith.mulf %1, %2 : vector<2x1024xf32>
    %cst = arith.constant 0.000000e+00 : f32
    %4 = vector.broadcast %cst : f32 to vector<2x1024xf32>
    %5 = arith.maximumf %3, %4 : vector<2x1024xf32>
    %c0_2 = arith.constant 0 : index
    %c0_3 = arith.constant 0 : index
    %6 = vector.load %arg3[%c0_2, %c0_3] : memref<2x1024xf32, #tpu.memory_space<vmem>>, vector<2x1024xf32>
    tpu.vector_store %arg3[%c0_2, %c0_3], %5 {strides = array<i32>} : memref<2x1024xf32, #tpu.memory_space<vmem>>, vector<2x1024xf32>,
    return
  }
  func.func @transform_0(%arg0: i32) -> i32 {
    %c0_i32 = arith.constant 0 : i32
    %c0_i32_0 = arith.constant 0 : i32
    return %c0_i32 : i32
  }
  func.func @transform_1(%arg0: i32) -> (i32, i32) {
    %c0_i32 = arith.constant 0 : i32
    %c0_i32_0 = arith.constant 0 : i32
    return %arg0, %c0_i32 : i32, i32
  }
  func.func @transform_2(%arg0: i32) -> (i32, i32) {
    %c0_i32 = arith.constant 0 : i32
    %c0_i32_0 = arith.constant 0 : i32
    return %arg0, %c0_i32 : i32, i32
  }
}

</mosaic_0001>

<llo_original>
// kernel: tpu_custom_call.1
$region0: #{tpu_custom_call.1}
  #allocation0 [shape = 'u32[]', space=smem, size = 0x4, offset = 0x4, fixed_abs, tag = 'smem constant byte address 0x4 - core index']
  #allocation1 [shape = 'u32[144,128]{1,0:T(1,128)}', space=vmem, size = 0x12000, scoped, tag = 'internal scratch']
  #allocation2 [shape = 'f32[1]{0:T(128)S(6)}', space=smem, size = 0x200, scoped, tag = 'scoped memory for tpu_custom_call.1']
  %s0 = inlined_call_operand.<no memory space> [shape: f32[1], index: 0, kind: input, shape index: {}]
  %s1 = inlined_call_operand.hbm [shape: f32[2,1024], index: 1, kind: input, shape index: {}]
  %s2 = inlined_call_operand.hbm [shape: f32[2,1024], index: 2, kind: output, shape index: {}]
  %s3 = sld [smem:[#allocation0]]
  $region22: #{tpu_custom_call.1} parent=0
    _
  %s5 = ssub.s32 1, %s3
  %s6 = scalar_select 0, %s5, %s3
  %7 = sst [smem:[#allocation2]] %s0
  $region1: #{tpu_custom_call.1} parent=0
    #allocation3 [shape = 'u8[8192]{0}', space=vmem, size = 0x2000, scoped, tag = 'input window, operand 1, single buffered']
    #allocation4 [shape = 's32[1]{0}', space=sflag, size = 0x4, scoped, tag = 'scoped memory for tpu_custom_call.1']
    #allocation5 [shape = 's32[1]{0}', space=sflag, size = 0x4, scoped, tag = 'scoped memory for tpu_custom_call.1']
    #allocation6 [shape = 'u8[8192]{0}', space=vmem, size = 0x2000, scoped, tag = 'output window, operand 0, single buffered']
    %8 = vsyncpa [#allocation4], 0
    %9 = vsyncpa [#allocation5], 0
    // Predicated region
    $region2: #{tpu_custom_call.1} parent=1 // pred_check
      _
    $region3: #{tpu_custom_call.1} parent=1 // pred_check_branch
      %11 = sbr.rel (0) target = $region5
    $region4: #{tpu_custom_call.1} parent=1 // pred_region
      _
    $region5: #{tpu_custom_call.1} parent=1 // pred_fallthru
      _
    // Predicated region
    $region6: #{tpu_custom_call.1} parent=1 // pred_check
      _
    $region7: #{tpu_custom_call.1} parent=1 // pred_check_branch
      %13 = sbr.rel (0) target = $region9
    $region8: #{tpu_custom_call.1} parent=1 // pred_region
      %s15 = ssub.s32 256, 256
      %16 = vsyncadd [#allocation4], %s15
      %s18 = sshll.u32 [#allocation3], 4
      %s19 = int_to_ptr.vmem [resolvable:$true] %s18
      %21 = dma.hbm_to_vmem [thread:$0]  %s1, 256, %s19, [#allocation4]
    $region9: #{tpu_custom_call.1} parent=1 // pred_fallthru
      _
    // Predicated region
    $region10: #{tpu_custom_call.1} parent=1 // pred_check
      _
    $region11: #{tpu_custom_call.1} parent=1 // pred_check_branch
      %23 = sbr.rel (0) target = $region13
    $region12: #{tpu_custom_call.1} parent=1 // pred_region
      %24 = dma.done [#allocation4], 256
    $region13: #{tpu_custom_call.1} parent=1 // pred_fallthru
      _
    %s25 = sld [smem:[#allocation2]]
    %v26 = vld [vmem:[#allocation3] sm:$0xff]
    %v27 = vld [vmem:[#allocation3 + $0x8] sm:$0xff]
    %v28 = vstv %s25
    %v29 = vmul.f32 %v26, %v28
    %v30 = vmul.f32 %v27, %v28
    %v31 = vmax.f32 %v29, 0.0
    %v32 = vmax.f32 %v30, 0.0
    %33 = vst [vmem:[#allocation6] sm:$0xff] %v31
    %34 = vst [vmem:[#allocation6 + $0x8] sm:$0xff] %v32
    // Predicated region
    $region14: #{tpu_custom_call.1} parent=1 // pred_check
      _
    $region15: #{tpu_custom_call.1} parent=1 // pred_check_branch
      %36 = sbr.rel (0) target = $region17
    $region16: #{tpu_custom_call.1} parent=1 // pred_region
      %s38 = ssub.s32 256, 256
      %39 = vsyncadd [#allocation5], %s38
      %s41 = sshll.u32 [#allocation6], 4
      %s42 = int_to_ptr.vmem [resolvable:$true] %s41
      %44 = dma.vmem_to_hbm [thread:$0]  %s42, 256, %s2, [#allocation5]
    $region17: #{tpu_custom_call.1} parent=1 // pred_fallthru
      _
    // Predicated region
    $region18: #{tpu_custom_call.1} parent=1 // pred_check
      _
    $region19: #{tpu_custom_call.1} parent=1 // pred_check_branch
      %46 = sbr.rel (0) target = $region21
    $region20: #{tpu_custom_call.1} parent=1 // pred_region
      %47 = dma.done [#allocation5], 256
    $region21: #{tpu_custom_call.1} parent=1 // pred_fallthru
      _
    %48 = vsyncpa [#allocation4], 1
    %49 = vsyncpa [#allocation5], 1

</llo_original>
